<compile_context>
chip_gen: v5e
topology: v5e:2x2
jax: 0.10.0
libtpu: 0.0.40
codegen_flags: <defaults>
</compile_context>

<pallas_src>
import functools

import jax
import jax.numpy as jnp
from jax.experimental import pallas as pl
from jax.experimental.pallas import tpu as pltpu


def _round_up(x, m):
    return ((x + m - 1) // m) * m


# --------------------------------------------------------------------------
# Kernel
# --------------------------------------------------------------------------
def vae_kernel(
    x_ref, eps_ref,
    enc_w1_ref, enc_b1_ref,
    enc_whead_ref, enc_bhead_ref,      # fused, lane-padded [mu | log_sigma] head
    dec_w1_ref, dec_b1_ref,
    dec_wmu_ref, dec_bmu_ref,
    mu_dec_ref, latent_ref,            # latent = [mu_enc(pad) | sigma_enc(pad)]
    *, d_lat, lat_pad,
):
    cdt = enc_w1_ref.dtype             # matmul-input dtype (bf16)

    # In-kernel cast: x is read from HBM once as f32 and cast on the VPU.
    x = x_ref[...].astype(cdt)                                  # (TB, D_in)
    eps = eps_ref[...]                                          # (TB, D_lat) f32

    # ---------------- Encoder ----------------
    h = jnp.dot(x, enc_w1_ref[...], preferred_element_type=jnp.float32)
    h = jnp.maximum(h + enc_b1_ref[...], 0.0)                   # (TB, H) f32

    head = jnp.dot(h.astype(cdt), enc_whead_ref[...],
                   preferred_element_type=jnp.float32)
    head = head + enc_bhead_ref[...]                            # (TB, 2*lat_pad)

    # Lanes [0, lat_pad) hold mu, lanes [lat_pad, 2*lat_pad) hold log-sigma.
    # Apply exp on the sigma lanes via a lane mask (no slicing / concat) and
    # store the full 128-lane-wide latent block with one unmasked store.
    lane = jax.lax.broadcasted_iota(jnp.int32, head.shape, 1)
    latent = jnp.where(lane < lat_pad, head, jnp.exp(head))     # f32
    latent_ref[...] = latent

    # -------- Reparameterization z = mu + sigma * eps (tiny, f32) ----------
    mu_enc = latent[:, :d_lat]                                  # (TB, D_lat)
    sigma_enc = latent[:, lat_pad:lat_pad + d_lat]              # (TB, D_lat)
    z = mu_enc + sigma_enc * eps                                # (TB, D_lat)

    # ---------------- Decoder ----------------
    hd = jnp.dot(z.astype(cdt), dec_w1_ref[...],
                 preferred_element_type=jnp.float32)
    hd = jnp.maximum(hd + dec_b1_ref[...], 0.0)                 # (TB, H) f32

    mu_dec = jnp.dot(hd.astype(cdt), dec_wmu_ref[...],
                     preferred_element_type=jnp.float32)
    mu_dec = jnp.tanh(mu_dec + dec_bmu_ref[...])                # (TB, D_in) f32

    mu_dec_ref[...] = mu_dec.astype(mu_dec_ref.dtype)


# --------------------------------------------------------------------------
# Tiling helpers
# --------------------------------------------------------------------------
def _vmem_bytes_estimate(tb, d_in, d_lat, lat_pad, hid, out_itemsize):
    rup = lambda n: _round_up(n, 128)
    est = 0
    est += 2 * tb * rup(d_in) * 4                     # x block (f32, double buffered)
    est += 2 * tb * rup(d_lat) * 4                    # eps block
    est += 2 * tb * rup(d_in) * out_itemsize          # mu_dec output block
    est += 2 * tb * (2 * lat_pad) * 4                 # latent output block
    est += 4 * tb * rup(hid) * 4                      # h / hd / head live intermediates (fudge)
    w = (rup(d_in) * rup(hid) + rup(hid) * 2 * lat_pad
         + rup(d_lat) * rup(hid) + rup(hid) * rup(d_in)) * 2   # bf16 weights
    b = (rup(hid) + 2 * lat_pad + rup(hid) + rup(d_in)) * 4    # f32 biases
    est += 2 * (w + b)                                # resident, double buffered
    return est


def _choose_tb(batch, tb_cap, d_in, d_lat, lat_pad, hid, out_itemsize,
               vmem_budget=36 * 1024 * 1024):
    if batch <= 256:
        return batch                                  # single full-batch block
    # Aim for >= 2 grid steps (v7x megacore), multiples of 256 (MXU M tile).
    tb = min(max(int(tb_cap), 256), _round_up(pl.cdiv(batch, 2), 256))
    tb = _round_up(tb, 256)
    while tb > 256 and _vmem_bytes_estimate(
            tb, d_in, d_lat, lat_pad, hid, out_itemsize) > vmem_budget:
        tb -= 256
    return tb


# --------------------------------------------------------------------------
# Wrapper
# --------------------------------------------------------------------------
@functools.partial(
    jax.jit,
    static_argnames=("tb", "compute_dtype", "out_dtype", "materialize_sigma_dec"))
def vae_forward(x, eps, params, *, tb=2048, compute_dtype=jnp.bfloat16,
                out_dtype=jnp.bfloat16, materialize_sigma_dec=False):
    """Fused VAE forward.

    x:   (B, input_dims) float32
    eps: (B, latent_dims) float32 -- the N(0,1) sample (drawn outside the
         nets, matching torch's self.N.sample()).

    Returns (mu_dec, sigma_dec, mu_enc, sigma_enc).  By default sigma_dec is
    the (1, 1) learned scalar (broadcast at the consumer instead of writing a
    full (B, D_in) constant array to HBM); pass materialize_sigma_dec=True to
    get the broadcasted array like the PyTorch module.
    """
    B, d_in = x.shape
    d_lat = eps.shape[1]
    hid = params["enc_w1"].shape[1]
    out_itemsize = jnp.dtype(out_dtype).itemsize

    # Pad each encoder head to `lat_pad` output lanes (zeros), then fuse, so
    # the latent output block is a lane-dense multiple of 128.
    lat_pad = _round_up(max(d_lat, 64), 64)
    pad_w = lambda w: jnp.pad(w, ((0, 0), (0, lat_pad - d_lat)))
    pad_b = lambda b: jnp.pad(b, ((0, 0), (0, lat_pad - d_lat)))
    enc_whead = jnp.concatenate([pad_w(params["enc_wmu"]),
                                 pad_w(params["enc_wsig"])], axis=1)
    enc_bhead = jnp.concatenate([pad_b(params["enc_bmu"]),
                                 pad_b(params["enc_bsig"])], axis=1)

    tb_eff = _choose_tb(B, tb, d_in, d_lat, lat_pad, hid, out_itemsize)
    grid = (pl.cdiv(B, tb_eff),)       # trailing partial block masked by Pallas

    cw = lambda a: a.astype(compute_dtype)   # weights are tiny; cast once here
    inputs = (
        x, eps,
        cw(params["enc_w1"]), params["enc_b1"],
        cw(enc_whead), enc_bhead,
        cw(params["dec_w1"]), params["dec_b1"],
        cw(params["dec_wmu"]), params["dec_bmu"],
    )

    def batch_spec(last):
        return pl.BlockSpec((tb_eff, last), lambda i: (i, 0))

    def resident_spec(arr):
        # Full-array block, constant block index -> stays resident in VMEM.
        return pl.BlockSpec(arr.shape, lambda i: (0, 0))

    in_specs = [batch_spec(d_in), batch_spec(d_lat)] + \
               [resident_spec(a) for a in inputs[2:]]

    # Advisory cost estimate so XLA overlaps surrounding ops with the call.
    flops = 2 * B * (d_in * hid + hid * 2 * lat_pad + d_lat * hid + hid * d_in)
    bytes_accessed = (B * d_in * 4 + B * d_lat * 4                # x, eps reads
                      + B * d_in * out_itemsize                   # mu_dec write
                      + B * 2 * lat_pad * 4                       # latent write
                      + 2 * (d_in * hid + hid * 2 * lat_pad
                             + d_lat * hid + hid * d_in)          # bf16 weights
                      + 4 * (2 * hid + 2 * lat_pad + d_in))       # f32 biases
    cost = pl.CostEstimate(flops=int(flops),
                           transcendentals=int(B * (2 * lat_pad + d_in)),
                           bytes_accessed=int(bytes_accessed))

    kernel = functools.partial(vae_kernel, d_lat=d_lat, lat_pad=lat_pad)

    mu_dec, latent = pl.pallas_call(
        kernel,
        out_shape=(
            jax.ShapeDtypeStruct((B, d_in), out_dtype),            # mu_dec
            jax.ShapeDtypeStruct((B, 2 * lat_pad), jnp.float32),   # [mu|sigma]_enc
        ),
        grid=grid,
        in_specs=in_specs,
        out_specs=(batch_spec(d_in), batch_spec(2 * lat_pad)),
        compiler_params=pltpu.CompilerParams(
            dimension_semantics=("parallel",),
            vmem_limit_bytes=48 * 1024 * 1024),
        cost_estimate=cost,
    )(*inputs)

    mu_enc = latent[:, :d_lat]
    sigma_enc = latent[:, lat_pad:lat_pad + d_lat]
    sigma_dec = params["dec_sigma"].reshape(1, 1)
    if materialize_sigma_dec:
        # Only if a caller really needs the torch-shaped constant array.
        sigma_dec = jnp.broadcast_to(sigma_dec, (B, d_in))
    return mu_dec, sigma_dec, mu_enc, sigma_enc


# --------------------------------------------------------------------------
# Parameter init (PyTorch nn.Linear-style), stored as (in, out) = torch W.T
# --------------------------------------------------------------------------
def init_params(key, input_dims, hidden_dims, latent_dims):
    ks = jax.random.split(key, 10)

    def lin(kw, kb, fan_in, fan_out):
        bound = 1.0 / jnp.sqrt(jnp.float32(fan_in))
        w = jax.random.uniform(kw, (fan_in, fan_out), jnp.float32, -bound, bound)
        b = jax.random.uniform(kb, (1, fan_out), jnp.float32, -bound, bound)
        return w, b

    enc_w1, enc_b1 = lin(ks[0], ks[1], input_dims, hidden_dims)
    enc_wmu, enc_bmu = lin(ks[2], ks[3], hidden_dims, latent_dims)
    enc_wsig, enc_bsig = lin(ks[4], ks[5], hidden_dims, latent_dims)
    dec_w1, dec_b1 = lin(ks[6], ks[7], latent_dims, hidden_dims)
    dec_wmu, dec_bmu = lin(ks[8], ks[9], hidden_dims, input_dims)
    dec_sigma = jnp.ones((1,), jnp.float32)   # decoder.sigma = Parameter(ones(1))

    return dict(
        enc_w1=enc_w1, enc_b1=enc_b1,
        enc_wmu=enc_wmu, enc_bmu=enc_bmu,
        enc_wsig=enc_wsig, enc_bsig=enc_bsig,
        dec_w1=dec_w1, dec_b1=dec_b1,
        dec_wmu=dec_wmu, dec_bmu=dec_bmu,
        dec_sigma=dec_sigma,
    )


def _reference(x, eps, p, compute_dtype):
    """Pure-JAX reference mirroring the kernel's bf16-input / f32-accum dots."""
    cd = compute_dtype
    f32 = jnp.float32
    h = jnp.dot(x.astype(cd), p["enc_w1"].astype(cd), preferred_element_type=f32)
    h = jnp.maximum(h + p["enc_b1"], 0.0)
    mu_enc = jnp.dot(h.astype(cd), p["enc_wmu"].astype(cd),
                     preferred_element_type=f32) + p["enc_bmu"]
    sigma_enc = jnp.exp(jnp.dot(h.astype(cd), p["enc_wsig"].astype(cd),
                                preferred_element_type=f32) + p["enc_bsig"])
    z = mu_enc + sigma_enc * eps
    hd = jnp.dot(z.astype(cd), p["dec_w1"].astype(cd), preferred_element_type=f32)
    hd = jnp.maximum(hd + p["dec_b1"], 0.0)
    mu_dec = jnp.tanh(jnp.dot(hd.astype(cd), p["dec_wmu"].astype(cd),
                              preferred_element_type=f32) + p["dec_bmu"])
    return mu_dec, mu_enc, sigma_enc


if __name__ == "__main__":
    # Small shapes consistent with the module defaults (784/256/2), scaled down.
    B, INPUT_DIMS, HIDDEN_DIMS, LATENT_DIMS = 32, 256, 128, 8

    key = jax.random.PRNGKey(0)
    k_x, k_eps, k_params, k_x2, k_eps2 = jax.random.split(key, 5)

    x = jax.random.normal(k_x, (B, INPUT_DIMS), jnp.float32)
    # TODO(synk): torch.distributions.Normal(0,1).sample() is drawn explicitly
    # via jax.random here (sampling is outside the nets in the reference too).
    eps = jax.random.normal(k_eps, (B, LATENT_DIMS), jnp.float32)
    params = init_params(k_params, INPUT_DIMS, HIDDEN_DIMS, LATENT_DIMS)

    def check(out, ref, tol):
        err = jnp.max(jnp.abs(out.astype(jnp.float32) - ref) / (1.0 + jnp.abs(ref)))
        assert float(err) < tol, float(err)

    # --- case 1: single full-batch block ---
    mu_dec, sigma_dec, mu_enc, sigma_enc = jax.block_until_ready(
        vae_forward(x, eps, params))
    r_mu_dec, r_mu_enc, r_sig_enc = _reference(x, eps, params, jnp.bfloat16)
    check(mu_dec, r_mu_dec, 2e-2)        # bf16 output tolerance
    check(mu_enc, r_mu_enc, 1e-2)
    check(sigma_enc, r_sig_enc, 1e-2)
    assert sigma_dec.shape == (1, 1) and float(sigma_dec[0, 0]) == 1.0
    # Optional torch-shaped sigma_dec (broadcast at the consumer):
    sig_full = jax.block_until_ready(
        vae_forward(x, eps, params, materialize_sigma_dec=True)[1])
    assert sig_full.shape == (B, INPUT_DIMS)

    # --- case 2: multi-block grid with a partial trailing block ---
    B2 = 300
    x2 = jax.random.normal(k_x2, (B2, INPUT_DIMS), jnp.float32)
    eps2 = jax.random.normal(k_eps2, (B2, LATENT_DIMS), jnp.float32)
    mu_dec2, _, mu_enc2, sigma_enc2 = jax.block_until_ready(
        vae_forward(x2, eps2, params, tb=256))
    r_mu_dec2, r_mu_enc2, r_sig_enc2 = _reference(x2, eps2, params, jnp.bfloat16)
    check(mu_dec2, r_mu_dec2, 2e-2)
    check(mu_enc2, r_mu_enc2, 1e-2)
    check(sigma_enc2, r_sig_enc2, 1e-2)

    print("KERNEL_OK")
</pallas_src>

<mosaic_0001>
module attributes {stable_mosaic.version = 11 : i64} {
  func.func @vae_kernel(%arg0: i32, %arg1: memref<32x256xf32, #tpu.memory_space<vmem>>, %arg2: memref<32x8xf32, #tpu.memory_space<vmem>>, %arg3: memref<256x128xbf16, #tpu.memory_space<vmem>>, %arg4: memref<1x128xf32, #tpu.memory_space<vmem>>, %arg5: memref<128x128xbf16, #tpu.memory_space<vmem>>, %arg6: memref<1x128xf32, #tpu.memory_space<vmem>>, %arg7: memref<8x128xbf16, #tpu.memory_space<vmem>>, %arg8: memref<1x128xf32, #tpu.memory_space<vmem>>, %arg9: memref<128x256xbf16, #tpu.memory_space<vmem>>, %arg10: memref<1x256xf32, #tpu.memory_space<vmem>>, %arg11: memref<32x256xbf16, #tpu.memory_space<vmem>>, %arg12: memref<32x128xf32, #tpu.memory_space<vmem>>) attributes {dimension_semantics = [#tpu.dimension_semantics<parallel>], iteration_bounds = array<i64: 1>, scalar_prefetch = 0 : i64, scratch_operands = 0 : i64, tpu.core_type = #tpu.core_type<tc>, window_params = [{transform_indices = @transform_0, window_bounds = array<i64: 32, 256>}, {transform_indices = @transform_1, window_bounds = array<i64: 32, 8>}, {pipeline_mode = #tpu.pipeline_mode<synchronous>, transform_indices = @transform_2, window_bounds = array<i64: 256, 128>}, {pipeline_mode = #tpu.pipeline_mode<synchronous>, transform_indices = @transform_3, window_bounds = array<i64: 1, 128>}, {pipeline_mode = #tpu.pipeline_mode<synchronous>, transform_indices = @transform_4, window_bounds = array<i64: 128, 128>}, {pipeline_mode = #tpu.pipeline_mode<synchronous>, transform_indices = @transform_5, window_bounds = array<i64: 1, 128>}, {pipeline_mode = #tpu.pipeline_mode<synchronous>, transform_indices = @transform_6, window_bounds = array<i64: 8, 128>}, {pipeline_mode = #tpu.pipeline_mode<synchronous>, transform_indices = @transform_7, window_bounds = array<i64: 1, 128>}, {pipeline_mode = #tpu.pipeline_mode<synchronous>, transform_indices = @transform_8, window_bounds = array<i64: 128, 256>}, {pipeline_mode = #tpu.pipeline_mode<synchronous>, transform_indices = @transform_9, window_bounds = array<i64: 1, 256>}, {transform_indices = @transform_10, window_bounds = array<i64: 32, 256>}, {transform_indices = @transform_11, window_bounds = array<i64: 32, 128>}]} {
    %c0 = arith.constant 0 : index
    %c0_0 = arith.constant 0 : index
    %0 = vector.load %arg1[%c0, %c0_0] : memref<32x256xf32, #tpu.memory_space<vmem>>, vector<32x256xf32>
    %1 = arith.truncf %0 : vector<32x256xf32> to vector<32x256xbf16>
    %c0_1 = arith.constant 0 : index
    %c0_2 = arith.constant 0 : index
    %2 = vector.load %arg2[%c0_1, %c0_2] : memref<32x8xf32, #tpu.memory_space<vmem>>, vector<32x8xf32>
    %c0_3 = arith.constant 0 : index
    %c0_4 = arith.constant 0 : index
    %3 = vector.load %arg3[%c0_3, %c0_4] : memref<256x128xbf16, #tpu.memory_space<vmem>>, vector<256x128xbf16>
    %cst = arith.constant dense<0.000000e+00> : vector<32x128xf32>
    %4 = tpu.matmul %1, %3, %cst {dimension_numbers = #tpu.dot_dimension_numbers<[1], [0], [0], [1], [0, 0, 1, 1], [], []>} : vector<32x256xbf16>, vector<256x128xbf16>, vector<32x128xf32> -> vector<32x128xf32>
    %c0_5 = arith.constant 0 : index
    %c0_6 = arith.constant 0 : index
    %5 = vector.load %arg4[%c0_5, %c0_6] : memref<1x128xf32, #tpu.memory_space<vmem>>, vector<1x128xf32>
    %6 = vector.broadcast %5 : vector<1x128xf32> to vector<32x128xf32>
    %7 = arith.addf %4, %6 : vector<32x128xf32>
    %cst_7 = arith.constant 0.000000e+00 : f32
    %8 = vector.broadcast %cst_7 : f32 to vector<32x128xf32>
    %9 = arith.maximumf %7, %8 : vector<32x128xf32>
    %10 = arith.truncf %9 : vector<32x128xf32> to vector<32x128xbf16>
    %c0_8 = arith.constant 0 : index
    %c0_9 = arith.constant 0 : index
    %11 = vector.load %arg5[%c0_8, %c0_9] : memref<128x128xbf16, #tpu.memory_space<vmem>>, vector<128x128xbf16>
    %cst_10 = arith.constant dense<0.000000e+00> : vector<32x128xf32>
    %12 = tpu.matmul %10, %11, %cst_10 {dimension_numbers = #tpu.dot_dimension_numbers<[1], [0], [0], [1], [0, 0, 1, 1], [], []>} : vector<32x128xbf16>, vector<128x128xbf16>, vector<32x128xf32> -> vector<32x128xf32>
    %c0_11 = arith.constant 0 : index
    %c0_12 = arith.constant 0 : index
    %13 = vector.load %arg6[%c0_11, %c0_12] : memref<1x128xf32, #tpu.memory_space<vmem>>, vector<1x128xf32>
    %14 = vector.broadcast %13 : vector<1x128xf32> to vector<32x128xf32>
    %15 = arith.addf %12, %14 : vector<32x128xf32>
    %16 = tpu.iota {dimensions = array<i32: 1>} : vector<32x128xi32>
    %c64_i32 = arith.constant 64 : i32
    %17 = vector.broadcast %c64_i32 : i32 to vector<32x128xi32>
    %18 = arith.cmpi slt, %16, %17 : vector<32x128xi32>
    %19 = math.exp %15 : vector<32x128xf32>
    %20 = arith.select %18, %15, %19 : vector<32x128xi1>, vector<32x128xf32>
    %c0_13 = arith.constant 0 : index
    %c0_14 = arith.constant 0 : index
    %21 = vector.load %arg12[%c0_13, %c0_14] : memref<32x128xf32, #tpu.memory_space<vmem>>, vector<32x128xf32>
    tpu.vector_store %arg12[%c0_13, %c0_14], %20 {strides = array<i32>} : memref<32x128xf32, #tpu.memory_space<vmem>>, vector<32x128xf32>,
    %22 = vector.extract_strided_slice %20 {offsets = [0, 0], sizes = [32, 8], strides = [1, 1]} : vector<32x128xf32> to vector<32x8xf32>
    %23 = vector.extract_strided_slice %20 {offsets = [0, 64], sizes = [32, 8], strides = [1, 1]} : vector<32x128xf32> to vector<32x8xf32>
    %24 = arith.mulf %23, %2 : vector<32x8xf32>
    %25 = arith.addf %22, %24 : vector<32x8xf32>
    %26 = arith.truncf %25 : vector<32x8xf32> to vector<32x8xbf16>
    %c0_15 = arith.constant 0 : index
    %c0_16 = arith.constant 0 : index
    %27 = vector.load %arg7[%c0_15, %c0_16] : memref<8x128xbf16, #tpu.memory_space<vmem>>, vector<8x128xbf16>
    %cst_17 = arith.constant dense<0.000000e+00> : vector<32x128xf32>
    %28 = tpu.matmul %26, %27, %cst_17 {dimension_numbers = #tpu.dot_dimension_numbers<[1], [0], [0], [1], [0, 0, 1, 1], [], []>} : vector<32x8xbf16>, vector<8x128xbf16>, vector<32x128xf32> -> vector<32x128xf32>
    %c0_18 = arith.constant 0 : index
    %c0_19 = arith.constant 0 : index
    %29 = vector.load %arg8[%c0_18, %c0_19] : memref<1x128xf32, #tpu.memory_space<vmem>>, vector<1x128xf32>
    %30 = vector.broadcast %29 : vector<1x128xf32> to vector<32x128xf32>
    %31 = arith.addf %28, %30 : vector<32x128xf32>
    %cst_20 = arith.constant 0.000000e+00 : f32
    %32 = vector.broadcast %cst_20 : f32 to vector<32x128xf32>
    %33 = arith.maximumf %31, %32 : vector<32x128xf32>
    %34 = arith.truncf %33 : vector<32x128xf32> to vector<32x128xbf16>
    %c0_21 = arith.constant 0 : index
    %c0_22 = arith.constant 0 : index
    %35 = vector.load %arg9[%c0_21, %c0_22] : memref<128x256xbf16, #tpu.memory_space<vmem>>, vector<128x256xbf16>
    %cst_23 = arith.constant dense<0.000000e+00> : vector<32x256xf32>
    %36 = tpu.matmul %34, %35, %cst_23 {dimension_numbers = #tpu.dot_dimension_numbers<[1], [0], [0], [1], [0, 0, 1, 1], [], []>} : vector<32x128xbf16>, vector<128x256xbf16>, vector<32x256xf32> -> vector<32x256xf32>
    %c0_24 = arith.constant 0 : index
    %c0_25 = arith.constant 0 : index
    %37 = vector.load %arg10[%c0_24, %c0_25] : memref<1x256xf32, #tpu.memory_space<vmem>>, vector<1x256xf32>
    %38 = vector.broadcast %37 : vector<1x256xf32> to vector<32x256xf32>
    %39 = arith.addf %36, %38 : vector<32x256xf32>
    %40 = math.tanh %39 : vector<32x256xf32>
    %41 = arith.truncf %40 : vector<32x256xf32> to vector<32x256xbf16>
    %c0_26 = arith.constant 0 : index
    %c0_27 = arith.constant 0 : index
    %42 = vector.load %arg11[%c0_26, %c0_27] : memref<32x256xbf16, #tpu.memory_space<vmem>>, vector<32x256xbf16>
    tpu.vector_store %arg11[%c0_26, %c0_27], %41 {strides = array<i32>} : memref<32x256xbf16, #tpu.memory_space<vmem>>, vector<32x256xbf16>,
    return
  }
  func.func @transform_0(%arg0: i32) -> (i32, i32) {
    %c0_i32 = arith.constant 0 : i32
    %c0_i32_0 = arith.constant 0 : i32
    return %arg0, %c0_i32 : i32, i32
  }
  func.func @transform_1(%arg0: i32) -> (i32, i32) {
    %c0_i32 = arith.constant 0 : i32
    %c0_i32_0 = arith.constant 0 : i32
    return %arg0, %c0_i32 : i32, i32
  }
  func.func @transform_2(%arg0: i32) -> (i32, i32) {
    %c0_i32 = arith.constant 0 : i32
    %c0_i32_0 = arith.constant 0 : i32
    %c0_i32_1 = arith.constant 0 : i32
    return %c0_i32, %c0_i32_0 : i32, i32
  }
  func.func @transform_3(%arg0: i32) -> (i32, i32) {
    %c0_i32 = arith.constant 0 : i32
    %c0_i32_0 = arith.constant 0 : i32
    %c0_i32_1 = arith.constant 0 : i32
    return %c0_i32, %c0_i32_0 : i32, i32
  }
  func.func @transform_4(%arg0: i32) -> (i32, i32) {
    %c0_i32 = arith.constant 0 : i32
    %c0_i32_0 = arith.constant 0 : i32
    %c0_i32_1 = arith.constant 0 : i32
    return %c0_i32, %c0_i32_0 : i32, i32
  }
  func.func @transform_5(%arg0: i32) -> (i32, i32) {
    %c0_i32 = arith.constant 0 : i32
    %c0_i32_0 = arith.constant 0 : i32
    %c0_i32_1 = arith.constant 0 : i32
    return %c0_i32, %c0_i32_0 : i32, i32
  }
  func.func @transform_6(%arg0: i32) -> (i32, i32) {
    %c0_i32 = arith.constant 0 : i32
    %c0_i32_0 = arith.constant 0 : i32
    %c0_i32_1 = arith.constant 0 : i32
    return %c0_i32, %c0_i32_0 : i32, i32
  }
  func.func @transform_7(%arg0: i32) -> (i32, i32) {
    %c0_i32 = arith.constant 0 : i32
    %c0_i32_0 = arith.constant 0 : i32
    %c0_i32_1 = arith.constant 0 : i32
    return %c0_i32, %c0_i32_0 : i32, i32
  }
  func.func @transform_8(%arg0: i32) -> (i32, i32) {
    %c0_i32 = arith.constant 0 : i32
    %c0_i32_0 = arith.constant 0 : i32
    %c0_i32_1 = arith.constant 0 : i32
    return %c0_i32, %c0_i32_0 : i32, i32
  }
  func.func @transform_9(%arg0: i32) -> (i32, i32) {
    %c0_i32 = arith.constant 0 : i32
    %c0_i32_0 = arith.constant 0 : i32
    %c0_i32_1 = arith.constant 0 : i32
    return %c0_i32, %c0_i32_0 : i32, i32
  }
  func.func @transform_10(%arg0: i32) -> (i32, i32) {
    %c0_i32 = arith.constant 0 : i32
    %c0_i32_0 = arith.constant 0 : i32
    return %arg0, %c0_i32 : i32, i32
  }
  func.func @transform_11(%arg0: i32) -> (i32, i32) {
    %c0_i32 = arith.constant 0 : i32
    %c0_i32_0 = arith.constant 0 : i32
    return %arg0, %c0_i32 : i32, i32
  }
}

</mosaic_0001>

<llo_original>
// kernel: vae_forward.1
$region0: #{vae_forward.1}
  #allocation0 [shape = 'u32[]', space=smem, size = 0x4, offset = 0x4, fixed_abs, tag = 'smem constant byte address 0x4 - core index']
  #allocation1 [shape = 'u32[72,128]{1,0:T(1,128)}', space=vmem, size = 0x9000, scoped, tag = 'internal scratch']
  %s0 = inlined_call_operand.vmem [shape: f32[32,256], index: 0, kind: input, shape index: {}]
  %s1 = inlined_call_operand.vmem [shape: f32[32,8], index: 1, kind: input, shape index: {}]
  %s2 = inlined_call_operand.vmem [shape: bf16[256,128], index: 2, kind: input, shape index: {}]
  %s3 = inlined_call_operand.vmem [shape: f32[1,128], index: 3, kind: input, shape index: {}]
  %s4 = inlined_call_operand.vmem [shape: bf16[128,128], index: 4, kind: input, shape index: {}]
  %s5 = inlined_call_operand.vmem [shape: f32[1,128], index: 5, kind: input, shape index: {}]
  %s6 = inlined_call_operand.vmem [shape: bf16[8,128], index: 6, kind: input, shape index: {}]
  %s7 = inlined_call_operand.vmem [shape: f32[1,128], index: 7, kind: input, shape index: {}]
  %s8 = inlined_call_operand.vmem [shape: bf16[128,256], index: 8, kind: input, shape index: {}]
  %s9 = inlined_call_operand.vmem [shape: f32[1,256], index: 9, kind: input, shape index: {}]
  %s10 = inlined_call_operand.hbm [shape: bf16[32,256], index: 10, kind: output, shape index: {0}]
  %s11 = inlined_call_operand.vmem [shape: f32[32,128], index: 11, kind: output, shape index: {1}]
  %12 = xla_tuple %s10, %s11
  %s13 = sld [smem:[#allocation0]]
  $region58: #{vae_forward.1} parent=0
    _
  %s15 = ssub.s32 1, %s13
  %s16 = scalar_select 0, %s15, %s13
  $region1: #{vae_forward.1} parent=0
    #allocation2 [shape = 'u8[16384]{0}', space=vmem, size = 0x4000, scoped, tag = 'output window, operand 0, single buffered']
    #allocation3 [shape = 's32[1]{0}', space=sflag, size = 0x4, scoped, tag = 'scoped memory for vae_forward.1']
    %17 = vsyncpa [#allocation3], 0
    // Predicated region
    $region2: #{vae_forward.1} parent=1 // pred_check
      _
    $region3: #{vae_forward.1} parent=1 // pred_check_branch
      %19 = sbr.rel (0) target = $region5
    $region4: #{vae_forward.1} parent=1 // pred_region
      _
    $region5: #{vae_forward.1} parent=1 // pred_fallthru
      _
    // Predicated region
    $region6: #{vae_forward.1} parent=1 // pred_check
      _
    $region7: #{vae_forward.1} parent=1 // pred_check_branch
      %21 = sbr.rel (0) target = $region9
    $region8: #{vae_forward.1} parent=1 // pred_region
      _
    $region9: #{vae_forward.1} parent=1 // pred_fallthru
      _
    // Predicated region
    $region10: #{vae_forward.1} parent=1 // pred_check
      _
    $region11: #{vae_forward.1} parent=1 // pred_check_branch
      %23 = sbr.rel (0) target = $region13
    $region12: #{vae_forward.1} parent=1 // pred_region
      _
    $region13: #{vae_forward.1} parent=1 // pred_fallthru
      _
    // Predicated region
    $region14: #{vae_forward.1} parent=1 // pred_check
      _
    $region15: #{vae_forward.1} parent=1 // pred_check_branch
      %25 = sbr.rel (0) target = $region17
    $region16: #{vae_forward.1} parent=1 // pred_region
      _
    $region17: #{vae_forward.1} parent=1 // pred_fallthru
      _
    // Predicated region
    $region18: #{vae_forward.1} parent=1 // pred_check
      _
    $region19: #{vae_forward.1} parent=1 // pred_check_branch
      %27 = sbr.rel (0) target = $region21
    $region20: #{vae_forward.1} parent=1 // pred_region
      _
    $region21: #{vae_forward.1} parent=1 // pred_fallthru
      _
    // Predicated region
    $region22: #{vae_forward.1} parent=1 // pred_check
      _
    $region23: #{vae_forward.1} parent=1 // pred_check_branch
      %29 = sbr.rel (0) target = $region25
    $region24: #{vae_forward.1} parent=1 // pred_region
      _
    $region25: #{vae_forward.1} parent=1 // pred_fallthru
      _
    // Predicated region
    $region26: #{vae_forward.1} parent=1 // pred_check
      _
    $region27: #{vae_forward.1} parent=1 // pred_check_branch
      %31 = sbr.rel (0) target = $region29
    $region28: #{vae_forward.1} parent=1 // pred_region
      _
    $region29: #{vae_forward.1} parent=1 // pred_fallthru
      _
    // Predicated region
    $region30: #{vae_forward.1} parent=1 // pred_check
      _
    $region31: #{vae_forward.1} parent=1 // pred_check_branch
      %33 = sbr.rel (0) target = $region33
    $region32: #{vae_forward.1} parent=1 // pred_region
      _
    $region33: #{vae_forward.1} parent=1 // pred_fallthru
      _
    // Predicated region
    $region34: #{vae_forward.1} parent=1 // pred_check
      _
    $region35: #{vae_forward.1} parent=1 // pred_check_branch
      %35 = sbr.rel (0) target = $region37
    $region36: #{vae_forward.1} parent=1 // pred_region
      _
    $region37: #{vae_forward.1} parent=1 // pred_fallthru
      _
    // Predicated region
    $region38: #{vae_forward.1} parent=1 // pred_check
      _
    $region39: #{vae_forward.1} parent=1 // pred_check_branch
      %37 = sbr.rel (0) target = $region41
    $region40: #{vae_forward.1} parent=1 // pred_region
      _
    $region41: #{vae_forward.1} parent=1 // pred_fallthru
      _
    %v39 = vld [vmem:[%s0] sm:$0xff]
    %v40 = vld [vmem:[%s0 + $0x8] sm:$0xff]
    %v41 = vld [vmem:[%s0 + $0x10] sm:$0xff]
    %v42 = vld [vmem:[%s0 + $0x18] sm:$0xff]
    %v43 = vld [vmem:[%s0 + $0x20] sm:$0xff]
    %v44 = vld [vmem:[%s0 + $0x28] sm:$0xff]
    %v45 = vld [vmem:[%s0 + $0x30] sm:$0xff]
    %v46 = vld [vmem:[%s0 + $0x38] sm:$0xff]
    %v47 = vpack.c.bf16 %v41, %v39
    %v48 = vpack.c.bf16 %v42, %v40
    %v49 = vpack.c.bf16 %v45, %v43
    %v50 = vpack.c.bf16 %v46, %v44
    %v51 = vld [vmem:[%s1] sm:$0xff]
    %v52 = vld [vmem:[%s1 + $0x8] sm:$0xff]
    %v53 = vld [vmem:[%s1 + $0x10] sm:$0xff]
    %v54 = vld [vmem:[%s1 + $0x18] sm:$0xff]
    %v55 = vld [vmem:[%s2] sm:$0xf]
    %v56 = vld [vmem:[%s2 + $0x4] sm:$0xf]
    %v57 = vld [vmem:[%s2 + $0x8] sm:$0xf]
    %v58 = vld [vmem:[%s2 + $0xc] sm:$0xf]
    %v59 = vld [vmem:[%s2 + $0x10] sm:$0xf]
    %v60 = vld [vmem:[%s2 + $0x14] sm:$0xf]
    %v61 = vld [vmem:[%s2 + $0x18] sm:$0xf]
    %v62 = vld [vmem:[%s2 + $0x1c] sm:$0xf]
    %v63 = vld [vmem:[%s2 + $0x20] sm:$0xf]
    %v64 = vld [vmem:[%s2 + $0x24] sm:$0xf]
    %v65 = vld [vmem:[%s2 + $0x28] sm:$0xf]
    %v66 = vld [vmem:[%s2 + $0x2c] sm:$0xf]
    %v67 = vld [vmem:[%s2 + $0x30] sm:$0xf]
    %v68 = vld [vmem:[%s2 + $0x34] sm:$0xf]
    %v69 = vld [vmem:[%s2 + $0x38] sm:$0xf]
    %v70 = vld [vmem:[%s2 + $0x3c] sm:$0xf]
    %v71 = vld [vmem:[%s2 + $0x40] sm:$0xf]
    %v72 = vld [vmem:[%s2 + $0x44] sm:$0xf]
    %v73 = vld [vmem:[%s2 + $0x48] sm:$0xf]
    %v74 = vld [vmem:[%s2 + $0x4c] sm:$0xf]
    %v75 = vld [vmem:[%s2 + $0x50] sm:$0xf]
    %v76 = vld [vmem:[%s2 + $0x54] sm:$0xf]
    %v77 = vld [vmem:[%s2 + $0x58] sm:$0xf]
    %v78 = vld [vmem:[%s2 + $0x5c] sm:$0xf]
    %v79 = vld [vmem:[%s2 + $0x60] sm:$0xf]
    %v80 = vld [vmem:[%s2 + $0x64] sm:$0xf]
    %v81 = vld [vmem:[%s2 + $0x68] sm:$0xf]
    %v82 = vld [vmem:[%s2 + $0x6c] sm:$0xf]
    %v83 = vld [vmem:[%s2 + $0x70] sm:$0xf]
    %v84 = vld [vmem:[%s2 + $0x74] sm:$0xf]
    %v85 = vld [vmem:[%s2 + $0x78] sm:$0xf]
    %v86 = vld [vmem:[%s2 + $0x7c] sm:$0xf]
    %v87 = vld [vmem:[%s3] sm:$0x1]
    %v89 = vperm.slane %v87, 0
    %v123 = vunpack.c.l.b16 %v55
    %v124 = vunpack.c.l.b16 %v56
    %v125 = vunpack.c.l.b16 %v57
    %v126 = vunpack.c.l.b16 %v58
    %v127 = vunpack.c.l.b16 %v59
    %v128 = vunpack.c.l.b16 %v60
    %v129 = vunpack.c.l.b16 %v61
    %v130 = vunpack.c.l.b16 %v62
    %v131 = vunpack.c.l.b16 %v63
    %v132 = vunpack.c.l.b16 %v64
    %v133 = vunpack.c.l.b16 %v65
    %v134 = vunpack.c.l.b16 %v66
    %v135 = vunpack.c.l.b16 %v67
    %v136 = vunpack.c.l.b16 %v68
    %v137 = vunpack.c.l.b16 %v69
    %v138 = vunpack.c.l.b16 %v70
    %v139 = vunpack.c.l.b16 %v71
    %v140 = vunpack.c.l.b16 %v72
    %v141 = vunpack.c.l.b16 %v73
    %v142 = vunpack.c.l.b16 %v74
    %v143 = vunpack.c.l.b16 %v75
    %v144 = vunpack.c.l.b16 %v76
    %v145 = vunpack.c.l.b16 %v77
    %v146 = vunpack.c.l.b16 %v78
    %v147 = vunpack.c.l.b16 %v79
    %v148 = vunpack.c.l.b16 %v80
    %v149 = vunpack.c.l.b16 %v81
    %v150 = vunpack.c.l.b16 %v82
    %v151 = vunpack.c.l.b16 %v83
    %v152 = vunpack.c.l.b16 %v84
    %v153 = vunpack.c.l.b16 %v85
    %v154 = vunpack.c.l.b16 %v86
    %v155 = vpack.c.b16 %v124, %v123
    %v156 = vpack.c.b16 %v126, %v125
    %v157 = vpack.c.b16 %v128, %v127
    %v158 = vpack.c.b16 %v130, %v129
    %v159 = vpack.c.b16 %v132, %v131
    %v160 = vpack.c.b16 %v134, %v133
    %v161 = vpack.c.b16 %v136, %v135
    %v162 = vpack.c.b16 %v138, %v137
    %v163 = vpack.c.b16 %v140, %v139
    %v164 = vpack.c.b16 %v142, %v141
    %v165 = vpack.c.b16 %v144, %v143
    %v166 = vpack.c.b16 %v146, %v145
    %v167 = vpack.c.b16 %v148, %v147
    %v168 = vpack.c.b16 %v150, %v149
    %v169 = vpack.c.b16 %v152, %v151
    %v170 = vpack.c.b16 %v154, %v153
    %187 = vmatpush.bf16.msra.mxu0 %v162
    %188 = vmatpush.bf16.msra.mxu0 %v161
    %189 = vmatpush.bf16.msra.mxu0 %v160
    %190 = vmatpush.bf16.msra.mxu0 %v159
    %191 = vmatpush.bf16.msra.mxu0 %v158
    %192 = vmatpush.bf16.msra.mxu0 %v157
    %193 = vmatpush.bf16.msra.mxu0 %v156
    %194 = vmatpush.bf16.msra.mxu0 %v155
    %195 = vmatmul.bf16.gmra.mxu0 %v47
    %v196 = vpop.f32.mrf.mxu0
    %v197 = vadd.f32 %v89, %v196
    %v198 = vpop.f32.mrf.mxu0
    %v199 = vadd.f32 %v89, %v198
    %200 = vmatmul.bf16.gmra.mxu0 %v49
    %v201 = vpop.f32.mrf.mxu0
    %v202 = vadd.f32 %v89, %v201
    %v203 = vpop.f32.mrf.mxu0
    %v204 = vadd.f32 %v89, %v203
    %205 = vdwg.mxu0
    %206 = vmatpush.bf16.msra.mxu0 %v170
    %207 = vmatpush.bf16.msra.mxu0 %v169
    %208 = vmatpush.bf16.msra.mxu0 %v168
    %209 = vmatpush.bf16.msra.mxu0 %v167
    %210 = vmatpush.bf16.msra.mxu0 %v166
    %211 = vmatpush.bf16.msra.mxu0 %v165
    %212 = vmatpush.bf16.msra.mxu0 %v164
    %213 = vmatpush.bf16.msra.mxu0 %v163
    %214 = vmatmul.bf16.gmra.mxu0 %v48
    %v215 = vpop.f32.mrf.mxu0
    %v216 = vadd.f32 %v197, %v215
    %v217 = vpop.f32.mrf.mxu0
    %v218 = vadd.f32 %v199, %v217
    %219 = vmatmul.bf16.gmra.mxu0 %v50
    %v220 = vpop.f32.mrf.mxu0
    %v221 = vadd.f32 %v202, %v220
    %v222 = vpop.f32.mrf.mxu0
    %v223 = vadd.f32 %v204, %v222
    %224 = vdwg.mxu0
    %v225 = vmax.f32 %v216, 0.0
    %v226 = vmax.f32 %v218, 0.0
    %v227 = vmax.f32 %v221, 0.0
    %v228 = vmax.f32 %v223, 0.0
    %v229 = vpack.c.bf16 %v226, %v225
    %v230 = vpack.c.bf16 %v228, %v227
    %v231 = vld [vmem:[%s4] sm:$0xf]
    %v232 = vld [vmem:[%s4 + $0x4] sm:$0xf]
    %v233 = vld [vmem:[%s4 + $0x8] sm:$0xf]
    %v234 = vld [vmem:[%s4 + $0xc] sm:$0xf]
    %v235 = vld [vmem:[%s4 + $0x10] sm:$0xf]
    %v236 = vld [vmem:[%s4 + $0x14] sm:$0xf]
    %v237 = vld [vmem:[%s4 + $0x18] sm:$0xf]
    %v238 = vld [vmem:[%s4 + $0x1c] sm:$0xf]
    %v239 = vld [vmem:[%s4 + $0x20] sm:$0xf]
    %v240 = vld [vmem:[%s4 + $0x24] sm:$0xf]
    %v241 = vld [vmem:[%s4 + $0x28] sm:$0xf]
    %v242 = vld [vmem:[%s4 + $0x2c] sm:$0xf]
    %v243 = vld [vmem:[%s4 + $0x30] sm:$0xf]
    %v244 = vld [vmem:[%s4 + $0x34] sm:$0xf]
    %v245 = vld [vmem:[%s4 + $0x38] sm:$0xf]
    %v246 = vld [vmem:[%s4 + $0x3c] sm:$0xf]
    %v247 = vld [vmem:[%s5] sm:$0x1]
    %v249 = vperm.slane %v247, 0
    %v267 = vunpack.c.l.b16 %v231
    %v268 = vunpack.c.l.b16 %v232
    %v269 = vunpack.c.l.b16 %v233
    %v270 = vunpack.c.l.b16 %v234
    %v271 = vunpack.c.l.b16 %v235
    %v272 = vunpack.c.l.b16 %v236
    %v273 = vunpack.c.l.b16 %v237
    %v274 = vunpack.c.l.b16 %v238
    %v275 = vunpack.c.l.b16 %v239
    %v276 = vunpack.c.l.b16 %v240
    %v277 = vunpack.c.l.b16 %v241
    %v278 = vunpack.c.l.b16 %v242
    %v279 = vunpack.c.l.b16 %v243
    %v280 = vunpack.c.l.b16 %v244
    %v281 = vunpack.c.l.b16 %v245
    %v282 = vunpack.c.l.b16 %v246
    %v283 = vpack.c.b16 %v268, %v267
    %v284 = vpack.c.b16 %v270, %v269
    %v285 = vpack.c.b16 %v272, %v271
    %v286 = vpack.c.b16 %v274, %v273
    %v287 = vpack.c.b16 %v276, %v275
    %v288 = vpack.c.b16 %v278, %v277
    %v289 = vpack.c.b16 %v280, %v279
    %v290 = vpack.c.b16 %v282, %v281
    %299 = vmatpush.bf16.msra.mxu0 %v290
    %300 = vmatpush.bf16.msra.mxu0 %v289
    %301 = vmatpush.bf16.msra.mxu0 %v288
    %302 = vmatpush.bf16.msra.mxu0 %v287
    %303 = vmatpush.bf16.msra.mxu0 %v286
    %304 = vmatpush.bf16.msra.mxu0 %v285
    %305 = vmatpush.bf16.msra.mxu0 %v284
    %306 = vmatpush.bf16.msra.mxu0 %v283
    %307 = vmatmul.bf16.gmra.mxu0 %v229
    %v308 = vpop.f32.mrf.mxu0
    %v309 = vadd.f32 %v249, %v308
    %v310 = vpop.f32.mrf.mxu0
    %v311 = vadd.f32 %v249, %v310
    %312 = vmatmul.bf16.gmra.mxu0 %v230
    %v313 = vpop.f32.mrf.mxu0
    %v314 = vadd.f32 %v249, %v313
    %v315 = vpop.f32.mrf.mxu0
    %v316 = vadd.f32 %v249, %v315
    %317 = vdwg.mxu0
    %v318 = vlaneseq
    %v319 = vand.u32 %v318, 127
    %vm320 = vcmp.lt.s32.totalorder %v319, 64
    %v321 = vmul.f32 %v309, 1.442695
    %v322 = vpow.pop %v321
    %v323 = vmul.f32 %v311, 1.442695
    %v324 = vpow.pop %v323
    %v325 = vmul.f32 %v314, 1.442695
    %v326 = vpow.pop %v325
    %v327 = vmul.f32 %v316, 1.442695
    %v328 = vpow.pop %v327
    %v329 = vsel %vm320, %v309, %v322
    %v330 = vsel %vm320, %v311, %v324
    %v331 = vsel %vm320, %v314, %v326
    %v332 = vsel %vm320, %v316, %v328
    %333 = vst [vmem:[%s11] sm:$0xff] %v329
    %334 = vst [vmem:[%s11 + $0x8] sm:$0xff] %v330
    %335 = vst [vmem:[%s11 + $0x10] sm:$0xff] %v331
    %336 = vst [vmem:[%s11 + $0x18] sm:$0xff] %v332
    %341 = vrot.lane.b32.xlu0 %v51, 64
    %v342 = vpop.permute.xlu0 %341
    %343 = vrot.lane.b32.xlu0 %v52, 64
    %v344 = vpop.permute.xlu0 %343
    %345 = vrot.lane.b32.xlu0 %v53, 64
    %v346 = vpop.permute.xlu0 %345
    %347 = vrot.lane.b32.xlu0 %v54, 64
    %v348 = vpop.permute.xlu0 %347
    %v353 = vmul.f32 %v329, %v342
    %v354 = vmul.f32 %v330, %v344
    %v355 = vmul.f32 %v331, %v346
    %v356 = vmul.f32 %v332, %v348
    %361 = vrot.lane.b32.xlu0 %v353, 64
    %v362 = vpop.permute.xlu0 %361
    %363 = vrot.lane.b32.xlu0 %v354, 64
    %v364 = vpop.permute.xlu0 %363
    %365 = vrot.lane.b32.xlu0 %v355, 64
    %v366 = vpop.permute.xlu0 %365
    %367 = vrot.lane.b32.xlu0 %v356, 64
    %v368 = vpop.permute.xlu0 %367
    %v373 = vadd.f32 %v329, %v362
    %v374 = vadd.f32 %v330, %v364
    %v375 = vadd.f32 %v331, %v366
    %v376 = vadd.f32 %v332, %v368
    %v377 = vpack.c.bf16 %v374, %v373
    %v378 = vpack.c.bf16 %v376, %v375
    %v379 = vld [vmem:[%s6] sm:$0xf]
    %v380 = vld [vmem:[%s7] sm:$0x1]
    %v382 = vperm.slane %v380, 0
    %vm384 = vcmask 64512
    %v386 = vsel %vm384, %v377, 0
    %v389 = vsel %vm384, %v378, 0
    %vm391 = vcmask 1043456
    %v393 = vsel %vm391, %v379, 0
    %395 = vmatpush.bf16.msra.mxu0 0
    %396 = vmatpush.bf16.msra.mxu0 0
    %397 = vmatpush.bf16.msra.mxu0 0
    %398 = vmatpush.bf16.msra.mxu0 0
    %399 = vmatpush.bf16.msra.mxu0 0
    %400 = vmatpush.bf16.msra.mxu0 0
    %401 = vmatpush.bf16.msra.mxu0 0
    %402 = vmatpush.bf16.msra.mxu0 %v393
    %403 = vmatmul.bf16.gmra.mxu0 %v386
    %v404 = vpop.f32.mrf.mxu0
    %v405 = vadd.f32 %v382, %v404
    %v406 = vpop.f32.mrf.mxu0
    %v407 = vadd.f32 %v382, %v406
    %408 = vmatmul.bf16.gmra.mxu0 %v389
    %v409 = vpop.f32.mrf.mxu0
    %v410 = vadd.f32 %v382, %v409
    %v411 = vpop.f32.mrf.mxu0
    %v412 = vadd.f32 %v382, %v411
    %413 = vdwg.mxu0
    %v414 = vmax.f32 %v405, 0.0
    %v415 = vmax.f32 %v407, 0.0
    %v416 = vmax.f32 %v410, 0.0
    %v417 = vmax.f32 %v412, 0.0
    %v418 = vpack.c.bf16 %v415, %v414
    %v419 = vpack.c.bf16 %v417, %v416
    %v420 = vld [vmem:[%s8] sm:$0xff]
    %v421 = vld [vmem:[%s8 + $0x8] sm:$0xff]
    %v422 = vld [vmem:[%s8 + $0x10] sm:$0xff]
    %v423 = vld [vmem:[%s8 + $0x18] sm:$0xff]
    %v424 = vld [vmem:[%s8 + $0x20] sm:$0xff]
    %v425 = vld [vmem:[%s8 + $0x28] sm:$0xff]
    %v426 = vld [vmem:[%s8 + $0x30] sm:$0xff]
    %v427 = vld [vmem:[%s8 + $0x38] sm:$0xff]
    %v428 = vld [vmem:[%s8 + $0x40] sm:$0xff]
    %v429 = vld [vmem:[%s8 + $0x48] sm:$0xff]
    %v430 = vld [vmem:[%s8 + $0x50] sm:$0xff]
    %v431 = vld [vmem:[%s8 + $0x58] sm:$0xff]
    %v432 = vld [vmem:[%s8 + $0x60] sm:$0xff]
    %v433 = vld [vmem:[%s8 + $0x68] sm:$0xff]
    %v434 = vld [vmem:[%s8 + $0x70] sm:$0xff]
    %v435 = vld [vmem:[%s8 + $0x78] sm:$0xff]
    %v436 = vld [vmem:[%s9] sm:$0x3]
    %v438 = vperm.slane %v436, 0
    %v439 = vperm.slane %v436, 1
    %v458 = vunpack.c.l.b16 %v420
    %v459 = vunpack.c.h.b16 %v420
    %v460 = vunpack.c.l.b16 %v421
    %v461 = vunpack.c.h.b16 %v421
    %v462 = vunpack.c.l.b16 %v422
    %v463 = vunpack.c.h.b16 %v422
    %v464 = vunpack.c.l.b16 %v423
    %v465 = vunpack.c.h.b16 %v423
    %v466 = vunpack.c.l.b16 %v424
    %v467 = vunpack.c.h.b16 %v424
    %v468 = vunpack.c.l.b16 %v425
    %v469 = vunpack.c.h.b16 %v425
    %v470 = vunpack.c.l.b16 %v426
    %v471 = vunpack.c.h.b16 %v426
    %v472 = vunpack.c.l.b16 %v427
    %v473 = vunpack.c.h.b16 %v427
    %v474 = vunpack.c.l.b16 %v428
    %v475 = vunpack.c.h.b16 %v428
    %v476 = vunpack.c.l.b16 %v429
    %v477 = vunpack.c.h.b16 %v429
    %v478 = vunpack.c.l.b16 %v430
    %v479 = vunpack.c.h.b16 %v430
    %v480 = vunpack.c.l.b16 %v431
    %v481 = vunpack.c.h.b16 %v431
    %v482 = vunpack.c.l.b16 %v432
    %v483 = vunpack.c.h.b16 %v432
    %v484 = vunpack.c.l.b16 %v433
    %v485 = vunpack.c.h.b16 %v433
    %v486 = vunpack.c.l.b16 %v434
    %v487 = vunpack.c.h.b16 %v434
    %v488 = vunpack.c.l.b16 %v435
    %v489 = vunpack.c.h.b16 %v435
    %v490 = vpack.c.b16 %v460, %v458
    %v491 = vpack.c.b16 %v461, %v459
    %v492 = vpack.c.b16 %v464, %v462
    %v493 = vpack.c.b16 %v465, %v463
    %v494 = vpack.c.b16 %v468, %v466
    %v495 = vpack.c.b16 %v469, %v467
    %v496 = vpack.c.b16 %v472, %v470
    %v497 = vpack.c.b16 %v473, %v471
    %v498 = vpack.c.b16 %v476, %v474
    %v499 = vpack.c.b16 %v477, %v475
    %v500 = vpack.c.b16 %v480, %v478
    %v501 = vpack.c.b16 %v481, %v479
    %v502 = vpack.c.b16 %v484, %v482
    %v503 = vpack.c.b16 %v485, %v483
    %v504 = vpack.c.b16 %v488, %v486
    %v505 = vpack.c.b16 %v489, %v487
    %522 = vmatpush.bf16.msra.mxu0 %v504
    %523 = vmatpush.bf16.msra.mxu0 %v502
    %524 = vmatpush.bf16.msra.mxu0 %v500
    %525 = vmatpush.bf16.msra.mxu0 %v498
    %526 = vmatpush.bf16.msra.mxu0 %v496
    %527 = vmatpush.bf16.msra.mxu0 %v494
    %528 = vmatpush.bf16.msra.mxu0 %v492
    %529 = vmatpush.bf16.msra.mxu0 %v490
    %530 = vmatmul.bf16.gmra.mxu0 %v418
    %v531 = vpop.f32.mrf.mxu0
    %v532 = vadd.f32 %v438, %v531
    %v533 = vpop.f32.mrf.mxu0
    %v534 = vadd.f32 %v438, %v533
    %535 = vmatmul.bf16.gmra.mxu0 %v419
    %v536 = vpop.f32.mrf.mxu0
    %v537 = vadd.f32 %v438, %v536
    %v538 = vpop.f32.mrf.mxu0
    %v539 = vadd.f32 %v438, %v538
    %540 = vdwg.mxu0
    %541 = vmatpush.bf16.msra.mxu0 %v505
    %542 = vmatpush.bf16.msra.mxu0 %v503
    %543 = vmatpush.bf16.msra.mxu0 %v501
    %544 = vmatpush.bf16.msra.mxu0 %v499
    %545 = vmatpush.bf16.msra.mxu0 %v497
    %546 = vmatpush.bf16.msra.mxu0 %v495
    %547 = vmatpush.bf16.msra.mxu0 %v493
    %548 = vmatpush.bf16.msra.mxu0 %v491
    %549 = vmatmul.bf16.gmra.mxu0 %v418
    %v550 = vpop.f32.mrf.mxu0
    %v551 = vadd.f32 %v439, %v550
    %v552 = vpop.f32.mrf.mxu0
    %v553 = vadd.f32 %v439, %v552
    %554 = vmatmul.bf16.gmra.mxu0 %v419
    %v555 = vpop.f32.mrf.mxu0
    %v556 = vadd.f32 %v439, %v555
    %v557 = vpop.f32.mrf.mxu0
    %v558 = vadd.f32 %v439, %v557
    %559 = vdwg.mxu0
    %v560 = vtanh.pop %v532
    %v561 = vtanh.pop %v551
    %v562 = vtanh.pop %v534
    %v563 = vtanh.pop %v553
    %v564 = vtanh.pop %v537
    %v565 = vtanh.pop %v556
    %v566 = vtanh.pop %v539
    %v567 = vtanh.pop %v558
    %v568 = vpack.c.bf16 %v561, %v560
    %v569 = vpack.c.bf16 %v563, %v562
    %v570 = vpack.c.bf16 %v565, %v564
    %v571 = vpack.c.bf16 %v567, %v566
    %572 = vst [vmem:[#allocation2] sm:$0xff] %v568
    %573 = vst [vmem:[#allocation2 + $0x8] sm:$0xff] %v569
    %574 = vst [vmem:[#allocation2 + $0x10] sm:$0xff] %v570
    %575 = vst [vmem:[#allocation2 + $0x18] sm:$0xff] %v571
    // Predicated region
    $region42: #{vae_forward.1} parent=1 // pred_check
      _
    $region43: #{vae_forward.1} parent=1 // pred_check_branch
      %577 = sbr.rel (0) target = $region45
    $region44: #{vae_forward.1} parent=1 // pred_region
      %579 = vsyncadd [#allocation3], 0
      %s580 = sshll.u32 [#allocation2], 4
      %s581 = int_to_ptr.vmem [resolvable:$true] %s580
      %s582 = sshll.u32 %s10, 4
      %s583 = int_to_ptr.hbm [resolvable:$true] %s582
      %588 = dma.vmem_to_hbm [thread:$0]  %s581, 512, %s583, [#allocation3], 128, 128, 8
    $region45: #{vae_forward.1} parent=1 // pred_fallthru
      _
    // Predicated region
    $region46: #{vae_forward.1} parent=1 // pred_check
      _
    $region47: #{vae_forward.1} parent=1 // pred_check_branch
      %590 = sbr.rel (0) target = $region49
    $region48: #{vae_forward.1} parent=1 // pred_region
      _
    $region49: #{vae_forward.1} parent=1 // pred_fallthru
      _
    // Predicated region
    $region50: #{vae_forward.1} parent=1 // pred_check
      _
    $region51: #{vae_forward.1} parent=1 // pred_check_branch
      %592 = sbr.rel (0) target = $region53
    $region52: #{vae_forward.1} parent=1 // pred_region
      %594 = dma.done [#allocation3], 512
    $region53: #{vae_forward.1} parent=1 // pred_fallthru
      _
    // Predicated region
    $region54: #{vae_forward.1} parent=1 // pred_check
      _
    $region55: #{vae_forward.1} parent=1 // pred_check_branch
      %596 = sbr.rel (0) target = $region57
    $region56: #{vae_forward.1} parent=1 // pred_region
      _
    $region57: #{vae_forward.1} parent=1 // pred_fallthru
      _
    %597 = vsyncpa [#allocation3], 1

</llo_original>
